<compile_context>
chip_gen: v7x
topology: tpu7x:2x2x1
jax: 0.10.0
libtpu: 0.0.40
codegen_flags: <defaults>
</compile_context>

<pallas_src>
import functools

import jax
import jax.numpy as jnp
from jax import lax
from jax.experimental import pallas as pl
from jax.experimental.pallas import tpu as pltpu


def _round_up(x, m):
    return ((x + m - 1) // m) * m


def _pad_to(a, shape):
    """Zero-pad `a` up to `shape` (no extra HBM pass when already aligned)."""
    if tuple(a.shape) == tuple(shape):
        return a
    idx = tuple(slice(0, d) for d in a.shape)
    return jnp.zeros(shape, a.dtype).at[idx].set(a)


def _ctrnn_kernel(xin_ref, wh_ref, h0_ref, out_ref, h_scratch, *,
                  alpha, t_block, approx_sigmoid):
    """One grid step = `t_block` recurrence steps for one batch block.

    Grid = (batch_blocks [parallel], time_blocks [sequential/arbitrary]).
    xin = x @ W_in_eff is precomputed in the wrapper, so the only serial work
    here is h @ W_h_eff + sigmoid + the leaky update.  The hidden state lives
    in vregs inside the unrolled loop; the VMEM scratch is touched exactly
    once on entry and once on exit of each time block.
    """
    # Fresh batch block (grid iterates batch-major, time-minor): load h0.
    @pl.when(pl.program_id(1) == 0)
    def _():
        h_scratch[...] = h0_ref[...]

    one_minus_alpha = 1.0 - alpha

    def step(i, h):
        pre = xin_ref[i] + jnp.dot(h.astype(wh_ref.dtype), wh_ref[...],
                                   preferred_element_type=jnp.float32)
        if approx_sigmoid:
            # exp and the approximate reciprocal both run on the otherwise-idle
            # EUP slot; avoids a VPU Newton divide on the serial chain.
            act = pl.reciprocal(1.0 + jnp.exp(-pre), approx=True)
        else:
            act = jax.nn.sigmoid(pre)
        h_new = h * one_minus_alpha + act * alpha
        out_ref[i] = h_new.astype(out_ref.dtype)
        return h_new

    h_final = lax.fori_loop(0, t_block, step, h_scratch[...], unroll=True)
    h_scratch[...] = h_final     # carry into the next time block


def ctrnn4pop_forward(x, w_in, w_h, initial_hidden, *,
                      percentage_excitatory=0.25, tau=50.0, dt=1.0,
                      t_block=32, batch_block=None,
                      matmul_dtype=jnp.float32,
                      approx_sigmoid=False,
                      single_buffer_wh=False):
    """Pallas implementation of CTRNN4pop.forward (bias=False, hidden=None).

    x:              (T, B, I) float32
    w_in:           (H, I)    float32   (input2h.weight)
    w_h:            (H, H)    float32   (h2h.weight)
    initial_hidden: (1, H)    float32
    Returns (output (T, B, H) f32, hidden (B, H) f32), matching the nn.Module.

    Generation guidance (not auto-detected):
      * v6e/v7x: matmul_dtype=jnp.bfloat16 halves the resident W_h VMEM and uses
        the full MXU rate; the recurrence/elementwise stays f32.
      * v7x (2 TensorCores): pass batch_block ~= ceil(B/2) rounded to 8 so the
        parallel batch grid axis has >= 2 blocks.
      * v7x with large H: single_buffer_wh=True drops the pointless second
        pipeline buffer on the resident W_h tile.
    """
    T, B, I = x.shape
    H = w_h.shape[0]
    n_exc = int(percentage_excitatory * H)
    alpha = float(dt) / float(tau)

    # ---- time-invariant weight masking (hoisted out of the kernel) ----------
    # mask = diag(s): +1 for excitatory rows, -1 otherwise; mask_input zeros
    # rows >= 2*n_exc.  Transposed so all matmuls are x @ W (lane dim = hidden).
    s = jnp.where(jnp.arange(H) < n_exc, 1.0, -1.0).astype(jnp.float32)
    m = jnp.where(jnp.arange(H) < 2 * n_exc, 1.0, 0.0).astype(jnp.float32)
    w_in_eff_t = jnp.abs(w_in.T.astype(jnp.float32)) * m[None, :]            # (I, H)
    w_h_eff_t = jnp.maximum(w_h.T.astype(jnp.float32), 0.0) * s[:, None]     # (H, H)

    # ---- hoist the input projection out of the recurrence -------------------
    # No cross-step dependence: one big (T*B, I) x (I, H) matmul in XLA instead
    # of T tiny M=B matmuls on the kernel's serial chain.
    xin = jnp.dot(x.reshape(T * B, I).astype(jnp.float32), w_in_eff_t,
                  precision="highest").reshape(T, B, H)

    # ---- pad to TPU-friendly tiles -------------------------------------------
    Hp = _round_up(H, 128)                       # lane dim
    Bp = _round_up(B, 8)                         # sublane dim
    Tb = Bp if batch_block is None else _round_up(min(batch_block, Bp), 8)
    Bp = _round_up(Bp, Tb)
    Tt = max(1, min(t_block, T))
    Tp = _round_up(T, Tt)

    # Padded W_h rows/cols are zero, so padded hidden lanes never leak into the
    # real lanes (they just integrate toward sigmoid(0)); padded batch rows and
    # padded time steps are sliced off below.
    xin_p = _pad_to(xin, (Tp, Bp, Hp))
    wh_p = _pad_to(w_h_eff_t.astype(matmul_dtype), (Hp, Hp))
    h0 = jnp.broadcast_to(initial_hidden.astype(jnp.float32), (B, H))
    h0_p = _pad_to(h0, (Bp, Hp))

    n_bb = Bp // Tb
    n_tb = Tp // Tt

    kernel = functools.partial(_ctrnn_kernel, alpha=alpha, t_block=Tt,
                               approx_sigmoid=approx_sigmoid)

    wh_spec_kwargs = {}
    if single_buffer_wh:
        # Resident tile (constant index_map): the default double buffer is waste.
        wh_spec_kwargs["pipeline_mode"] = pl.Buffered(1)

    grid_spec = pltpu.PrefetchScalarGridSpec(
        num_scalar_prefetch=0,
        grid=(n_bb, n_tb),
        in_specs=[
            pl.BlockSpec((Tt, Tb, Hp), lambda b, t: (t, b, 0)),              # xin block
            pl.BlockSpec((Hp, Hp), lambda b, t: (0, 0), **wh_spec_kwargs),   # W_h_eff (resident)
            pl.BlockSpec((Tb, Hp), lambda b, t: (b, 0)),                     # h0 per batch block
        ],
        out_specs=pl.BlockSpec((Tt, Tb, Hp), lambda b, t: (t, b, 0)),
        scratch_shapes=[pltpu.VMEM((Tb, Hp), jnp.float32)],                  # hidden carry
    )

    # ---- scoped VMEM limit: raise above v5e's ~16 MiB default, cap below the
    # physical capacity (v7x: 64 MiB) minus headroom --------------------------
    wh_bufs = 1 if single_buffer_wh else 2
    itemsize = jnp.dtype(matmul_dtype).itemsize
    vmem_est = (wh_bufs * itemsize * Hp * Hp            # resident W_h
                + 2 * 4 * Tt * Tb * Hp                  # xin blocks (double buffered)
                + 2 * 4 * Tt * Tb * Hp                  # out blocks (double buffered)
                + 2 * 4 * Tb * Hp                       # h0 blocks
                + 4 * Tb * Hp)                          # hidden scratch
    try:
        cap = int(pltpu.get_tpu_info().vmem_capacity_bytes)
    except Exception:                                   # pragma: no cover
        cap = 64 << 20                                  # most conservative generation
    vmem_limit = int(max(min(max(2 * vmem_est, 32 << 20), cap - (8 << 20)),
                         16 << 20))

    out_p = pl.pallas_call(
        kernel,
        grid_spec=grid_spec,
        out_shape=jax.ShapeDtypeStruct((Tp, Bp, Hp), jnp.float32),
        compiler_params=pltpu.CompilerParams(
            dimension_semantics=("parallel", "arbitrary"),
            vmem_limit_bytes=vmem_limit),
    )(xin_p, wh_p, h0_p)

    output = out_p[:T, :B, :H]
    hidden = out_p[T - 1, :B, :H]    # the value the module returns as `hidden`
    return output, hidden


def ctrnn4pop_reference(x, w_in, w_h, initial_hidden, *,
                        percentage_excitatory=0.25, tau=50.0, dt=1.0):
    """Pure-JAX reference mirroring the PyTorch semantics."""
    T, B, _ = x.shape
    H = w_h.shape[0]
    n_exc = int(percentage_excitatory * H)
    alpha = float(dt) / float(tau)

    s = jnp.where(jnp.arange(H) < n_exc, 1.0, -1.0).astype(jnp.float32)
    m = jnp.where(jnp.arange(H) < 2 * n_exc, 1.0, 0.0).astype(jnp.float32)
    w_in_eff = jnp.abs(w_in) * m[:, None]                 # |W_in| * mask_input
    w_h_eff = jnp.maximum(w_h, 0.0) * s[None, :]          # relu(W_h) @ diag(s)

    h = jnp.broadcast_to(initial_hidden, (B, H)).astype(jnp.float32)
    outs = []
    for t in range(T):
        pre = (jnp.dot(x[t], w_in_eff.T, precision="highest")
               + jnp.dot(h, w_h_eff.T, precision="highest"))
        h = h * (1.0 - alpha) + jax.nn.sigmoid(pre) * alpha
        outs.append(h)
    return jnp.stack(outs, axis=0), h


if __name__ == "__main__":
    # Small, module-consistent shapes: seq=8, batch=4, input_size=16, hidden=32.
    T, B, I, H = 8, 4, 16, 32
    key = jax.random.PRNGKey(0)
    k_x, k_win, k_wh1, k_wh2, k_h0 = jax.random.split(key, 5)
    n_exc = int(0.25 * H)

    x = jax.random.normal(k_x, (T, B, I), dtype=jnp.float32)
    # Deterministic synthetic parameter init (shapes/signs consistent with __init__).
    w_in = jnp.abs(jax.random.normal(k_win, (H, I), dtype=jnp.float32)) * 0.5
    wh_exc = jnp.clip(jax.random.normal(k_wh1, (H, n_exc)) * 0.5 + 1.0, 0.0, 2.0)
    wh_inh = jnp.clip(jax.random.normal(k_wh2, (H, H - n_exc)) * 0.5, 0.0, 2.0)
    w_h = jnp.concatenate([wh_exc, wh_inh], axis=-1).astype(jnp.float32)
    initial_hidden = jax.random.uniform(k_h0, (1, H), minval=-1.0, maxval=1.0,
                                        dtype=jnp.float32)

    out_ref, h_ref = ctrnn4pop_reference(x, w_in, w_h, initial_hidden)

    # 1) Default path (f32 W_h, exact sigmoid; t_block clamps to T -> one block).
    #    Tolerance covers MXU f32 pass-decomposition differences vs the XLA ref.
    out, h_last = ctrnn4pop_forward(x, w_in, w_h, initial_hidden)
    out = jax.block_until_ready(out)
    h_last = jax.block_until_ready(h_last)
    assert out.shape == (T, B, H) and h_last.shape == (B, H)
    assert jnp.allclose(out, out_ref, rtol=2e-3, atol=2e-3)
    assert jnp.allclose(h_last, h_ref, rtol=2e-3, atol=2e-3)

    # 2) Multi-time-block path: exercises the VMEM hidden carry across grid
    #    steps and time padding (T=8, t_block=3 -> Tp=9, 3 sequential blocks).
    out2, h2 = ctrnn4pop_forward(x, w_in, w_h, initial_hidden, t_block=3)
    out2 = jax.block_until_ready(out2)
    assert jnp.allclose(out2, out_ref, rtol=2e-3, atol=2e-3)
    assert jnp.allclose(h2, h_ref, rtol=2e-3, atol=2e-3)

    # 3) bf16 resident W_h + EUP approx sigmoid (v6e/v7x throughput path).
    #    Recurrence stays f32; bf16 rounding compounds with T, so the loose
    #    tolerance is only claimed for short sequences.
    out3, h3 = ctrnn4pop_forward(x, w_in, w_h, initial_hidden,
                                 matmul_dtype=jnp.bfloat16, approx_sigmoid=True)
    out3 = jax.block_until_ready(out3)
    assert jnp.allclose(out3, out_ref, rtol=2e-2, atol=2e-2)
    assert jnp.allclose(h3, h_ref, rtol=2e-2, atol=2e-2)

    # TODO(synk): per-generation auto-defaults (bf16 on v6e/v7x, 2-way batch
    # split on v7x) and the matmul_push_rhs/acc_lhs resident-W_h MXU path are
    # left as caller options rather than auto-detected here.
    print("KERNEL_OK")
</pallas_src>

<mosaic_0001>
module attributes {stable_mosaic.version = 11 : i64} {
  func.func @_ctrnn_kernel(%arg0: i32, %arg1: i32, %arg2: memref<8x8x128xf32, #tpu.memory_space<vmem>>, %arg3: memref<128x128xf32, #tpu.memory_space<vmem>>, %arg4: memref<8x128xf32, #tpu.memory_space<vmem>>, %arg5: memref<8x8x128xf32, #tpu.memory_space<vmem>>, %arg6: memref<8x128xf32, #tpu.memory_space<vmem>>) attributes {dimension_semantics = [#tpu.dimension_semantics<parallel>, #tpu.dimension_semantics<arbitrary>], iteration_bounds = array<i64: 1, 1>, scalar_prefetch = 0 : i64, scratch_operands = 1 : i64, tpu.core_type = #tpu.core_type<tc>, window_params = [{transform_indices = @transform_0, window_bounds = array<i64: 8, 8, 128>}, {pipeline_mode = #tpu.pipeline_mode<synchronous>, transform_indices = @transform_1, window_bounds = array<i64: 128, 128>}, {transform_indices = @transform_2, window_bounds = array<i64: 8, 128>}, {transform_indices = @transform_3, window_bounds = array<i64: 8, 8, 128>}]} {
    %c0_i32 = arith.constant 0 : i32
    %0 = arith.cmpi eq, %arg1, %c0_i32 : i32
    %1 = arith.extui %0 : i1 to i32
    %c0_i32_0 = arith.constant 0 : i32
    %2 = arith.cmpi ne, %1, %c0_i32_0 : i32
    scf.if %2 {
      %c0_84 = arith.constant 0 : index
      %c0_85 = arith.constant 0 : index
      %165 = vector.load %arg4[%c0_84, %c0_85] : memref<8x128xf32, #tpu.memory_space<vmem>>, vector<8x128xf32>
      %c0_86 = arith.constant 0 : index
      %c0_87 = arith.constant 0 : index
      %166 = vector.load %arg6[%c0_86, %c0_87] : memref<8x128xf32, #tpu.memory_space<vmem>>, vector<8x128xf32>
      tpu.vector_store %arg6[%c0_86, %c0_87], %165 {strides = array<i32>} : memref<8x128xf32, #tpu.memory_space<vmem>>, vector<8x128xf32>,
    } else {
    }
    %c0 = arith.constant 0 : index
    %c0_1 = arith.constant 0 : index
    %3 = vector.load %arg6[%c0, %c0_1] : memref<8x128xf32, #tpu.memory_space<vmem>>, vector<8x128xf32>
    %c0_i32_2 = arith.constant 0 : i32
    %4 = arith.index_cast %c0_i32_2 : i32 to index
    %c0_3 = arith.constant 0 : index
    %c0_4 = arith.constant 0 : index
    %5 = vector.load %arg2[%4, %c0_3, %c0_4] : memref<8x8x128xf32, #tpu.memory_space<vmem>>, vector<1x8x128xf32>
    %6 = vector.shape_cast %5 : vector<1x8x128xf32> to vector<8x128xf32>
    %c0_5 = arith.constant 0 : index
    %c0_6 = arith.constant 0 : index
    %7 = vector.load %arg3[%c0_5, %c0_6] : memref<128x128xf32, #tpu.memory_space<vmem>>, vector<128x128xf32>
    %cst = arith.constant dense<0.000000e+00> : vector<8x128xf32>
    %8 = tpu.matmul %3, %7, %cst {dimension_numbers = #tpu.dot_dimension_numbers<[1], [0], [0], [1], [0, 0, 1, 1], [], []>} : vector<8x128xf32>, vector<128x128xf32>, vector<8x128xf32> -> vector<8x128xf32>
    %9 = arith.addf %6, %8 : vector<8x128xf32>
    %10 = arith.negf %9 : vector<8x128xf32>
    %11 = math.exp %10 : vector<8x128xf32>
    %cst_7 = arith.constant 1.000000e+00 : f32
    %12 = vector.broadcast %cst_7 : f32 to vector<8x128xf32>
    %13 = arith.addf %12, %11 : vector<8x128xf32>
    %14 = arith.divf %12, %13 : vector<8x128xf32>
    %cst_8 = arith.constant 9.800000e-01 : f32
    %15 = vector.broadcast %cst_8 : f32 to vector<8x128xf32>
    %16 = arith.mulf %3, %15 : vector<8x128xf32>
    %cst_9 = arith.constant 2.000000e-02 : f32
    %17 = vector.broadcast %cst_9 : f32 to vector<8x128xf32>
    %18 = arith.mulf %14, %17 : vector<8x128xf32>
    %19 = arith.addf %16, %18 : vector<8x128xf32>
    %20 = arith.index_cast %c0_i32_2 : i32 to index
    %c0_10 = arith.constant 0 : index
    %c0_11 = arith.constant 0 : index
    %21 = vector.load %arg5[%20, %c0_10, %c0_11] : memref<8x8x128xf32, #tpu.memory_space<vmem>>, vector<1x8x128xf32>
    %22 = vector.shape_cast %21 : vector<1x8x128xf32> to vector<8x128xf32>
    %23 = vector.shape_cast %19 : vector<8x128xf32> to vector<1x8x128xf32>
    tpu.vector_store %arg5[%20, %c0_10, %c0_11], %23 {strides = array<i32>} : memref<8x8x128xf32, #tpu.memory_space<vmem>>, vector<1x8x128xf32>,
    %c1_i32 = arith.constant 1 : i32
    %24 = arith.index_cast %c1_i32 : i32 to index
    %c0_12 = arith.constant 0 : index
    %c0_13 = arith.constant 0 : index
    %25 = vector.load %arg2[%24, %c0_12, %c0_13] : memref<8x8x128xf32, #tpu.memory_space<vmem>>, vector<1x8x128xf32>
    %26 = vector.shape_cast %25 : vector<1x8x128xf32> to vector<8x128xf32>
    %c0_14 = arith.constant 0 : index
    %c0_15 = arith.constant 0 : index
    %27 = vector.load %arg3[%c0_14, %c0_15] : memref<128x128xf32, #tpu.memory_space<vmem>>, vector<128x128xf32>
    %cst_16 = arith.constant dense<0.000000e+00> : vector<8x128xf32>
    %28 = tpu.matmul %19, %27, %cst_16 {dimension_numbers = #tpu.dot_dimension_numbers<[1], [0], [0], [1], [0, 0, 1, 1], [], []>} : vector<8x128xf32>, vector<128x128xf32>, vector<8x128xf32> -> vector<8x128xf32>
    %29 = arith.addf %26, %28 : vector<8x128xf32>
    %30 = arith.negf %29 : vector<8x128xf32>
    %31 = math.exp %30 : vector<8x128xf32>
    %cst_17 = arith.constant 1.000000e+00 : f32
    %32 = vector.broadcast %cst_17 : f32 to vector<8x128xf32>
    %33 = arith.addf %32, %31 : vector<8x128xf32>
    %34 = arith.divf %32, %33 : vector<8x128xf32>
    %cst_18 = arith.constant 9.800000e-01 : f32
    %35 = vector.broadcast %cst_18 : f32 to vector<8x128xf32>
    %36 = arith.mulf %19, %35 : vector<8x128xf32>
    %cst_19 = arith.constant 2.000000e-02 : f32
    %37 = vector.broadcast %cst_19 : f32 to vector<8x128xf32>
    %38 = arith.mulf %34, %37 : vector<8x128xf32>
    %39 = arith.addf %36, %38 : vector<8x128xf32>
    %40 = arith.index_cast %c1_i32 : i32 to index
    %c0_20 = arith.constant 0 : index
    %c0_21 = arith.constant 0 : index
    %41 = vector.load %arg5[%40, %c0_20, %c0_21] : memref<8x8x128xf32, #tpu.memory_space<vmem>>, vector<1x8x128xf32>
    %42 = vector.shape_cast %41 : vector<1x8x128xf32> to vector<8x128xf32>
    %43 = vector.shape_cast %39 : vector<8x128xf32> to vector<1x8x128xf32>
    tpu.vector_store %arg5[%40, %c0_20, %c0_21], %43 {strides = array<i32>} : memref<8x8x128xf32, #tpu.memory_space<vmem>>, vector<1x8x128xf32>,
    %c2_i32 = arith.constant 2 : i32
    %44 = arith.index_cast %c2_i32 : i32 to index
    %c0_22 = arith.constant 0 : index
    %c0_23 = arith.constant 0 : index
    %45 = vector.load %arg2[%44, %c0_22, %c0_23] : memref<8x8x128xf32, #tpu.memory_space<vmem>>, vector<1x8x128xf32>
    %46 = vector.shape_cast %45 : vector<1x8x128xf32> to vector<8x128xf32>
    %c0_24 = arith.constant 0 : index
    %c0_25 = arith.constant 0 : index
    %47 = vector.load %arg3[%c0_24, %c0_25] : memref<128x128xf32, #tpu.memory_space<vmem>>, vector<128x128xf32>
    %cst_26 = arith.constant dense<0.000000e+00> : vector<8x128xf32>
    %48 = tpu.matmul %39, %47, %cst_26 {dimension_numbers = #tpu.dot_dimension_numbers<[1], [0], [0], [1], [0, 0, 1, 1], [], []>} : vector<8x128xf32>, vector<128x128xf32>, vector<8x128xf32> -> vector<8x128xf32>
    %49 = arith.addf %46, %48 : vector<8x128xf32>
    %50 = arith.negf %49 : vector<8x128xf32>
    %51 = math.exp %50 : vector<8x128xf32>
    %cst_27 = arith.constant 1.000000e+00 : f32
    %52 = vector.broadcast %cst_27 : f32 to vector<8x128xf32>
    %53 = arith.addf %52, %51 : vector<8x128xf32>
    %54 = arith.divf %52, %53 : vector<8x128xf32>
    %cst_28 = arith.constant 9.800000e-01 : f32
    %55 = vector.broadcast %cst_28 : f32 to vector<8x128xf32>
    %56 = arith.mulf %39, %55 : vector<8x128xf32>
    %cst_29 = arith.constant 2.000000e-02 : f32
    %57 = vector.broadcast %cst_29 : f32 to vector<8x128xf32>
    %58 = arith.mulf %54, %57 : vector<8x128xf32>
    %59 = arith.addf %56, %58 : vector<8x128xf32>
    %60 = arith.index_cast %c2_i32 : i32 to index
    %c0_30 = arith.constant 0 : index
    %c0_31 = arith.constant 0 : index
    %61 = vector.load %arg5[%60, %c0_30, %c0_31] : memref<8x8x128xf32, #tpu.memory_space<vmem>>, vector<1x8x128xf32>
    %62 = vector.shape_cast %61 : vector<1x8x128xf32> to vector<8x128xf32>
    %63 = vector.shape_cast %59 : vector<8x128xf32> to vector<1x8x128xf32>
    tpu.vector_store %arg5[%60, %c0_30, %c0_31], %63 {strides = array<i32>} : memref<8x8x128xf32, #tpu.memory_space<vmem>>, vector<1x8x128xf32>,
    %c3_i32 = arith.constant 3 : i32
    %64 = arith.index_cast %c3_i32 : i32 to index
    %c0_32 = arith.constant 0 : index
    %c0_33 = arith.constant 0 : index
    %65 = vector.load %arg2[%64, %c0_32, %c0_33] : memref<8x8x128xf32, #tpu.memory_space<vmem>>, vector<1x8x128xf32>
    %66 = vector.shape_cast %65 : vector<1x8x128xf32> to vector<8x128xf32>
    %c0_34 = arith.constant 0 : index
    %c0_35 = arith.constant 0 : index
    %67 = vector.load %arg3[%c0_34, %c0_35] : memref<128x128xf32, #tpu.memory_space<vmem>>, vector<128x128xf32>
    %cst_36 = arith.constant dense<0.000000e+00> : vector<8x128xf32>
    %68 = tpu.matmul %59, %67, %cst_36 {dimension_numbers = #tpu.dot_dimension_numbers<[1], [0], [0], [1], [0, 0, 1, 1], [], []>} : vector<8x128xf32>, vector<128x128xf32>, vector<8x128xf32> -> vector<8x128xf32>
    %69 = arith.addf %66, %68 : vector<8x128xf32>
    %70 = arith.negf %69 : vector<8x128xf32>
    %71 = math.exp %70 : vector<8x128xf32>
    %cst_37 = arith.constant 1.000000e+00 : f32
    %72 = vector.broadcast %cst_37 : f32 to vector<8x128xf32>
    %73 = arith.addf %72, %71 : vector<8x128xf32>
    %74 = arith.divf %72, %73 : vector<8x128xf32>
    %cst_38 = arith.constant 9.800000e-01 : f32
    %75 = vector.broadcast %cst_38 : f32 to vector<8x128xf32>
    %76 = arith.mulf %59, %75 : vector<8x128xf32>
    %cst_39 = arith.constant 2.000000e-02 : f32
    %77 = vector.broadcast %cst_39 : f32 to vector<8x128xf32>
    %78 = arith.mulf %74, %77 : vector<8x128xf32>
    %79 = arith.addf %76, %78 : vector<8x128xf32>
    %80 = arith.index_cast %c3_i32 : i32 to index
    %c0_40 = arith.constant 0 : index
    %c0_41 = arith.constant 0 : index
    %81 = vector.load %arg5[%80, %c0_40, %c0_41] : memref<8x8x128xf32, #tpu.memory_space<vmem>>, vector<1x8x128xf32>
    %82 = vector.shape_cast %81 : vector<1x8x128xf32> to vector<8x128xf32>
    %83 = vector.shape_cast %79 : vector<8x128xf32> to vector<1x8x128xf32>
    tpu.vector_store %arg5[%80, %c0_40, %c0_41], %83 {strides = array<i32>} : memref<8x8x128xf32, #tpu.memory_space<vmem>>, vector<1x8x128xf32>,
    %c4_i32 = arith.constant 4 : i32
    %84 = arith.index_cast %c4_i32 : i32 to index
    %c0_42 = arith.constant 0 : index
    %c0_43 = arith.constant 0 : index
    %85 = vector.load %arg2[%84, %c0_42, %c0_43] : memref<8x8x128xf32, #tpu.memory_space<vmem>>, vector<1x8x128xf32>
    %86 = vector.shape_cast %85 : vector<1x8x128xf32> to vector<8x128xf32>
    %c0_44 = arith.constant 0 : index
    %c0_45 = arith.constant 0 : index
    %87 = vector.load %arg3[%c0_44, %c0_45] : memref<128x128xf32, #tpu.memory_space<vmem>>, vector<128x128xf32>
    %cst_46 = arith.constant dense<0.000000e+00> : vector<8x128xf32>
    %88 = tpu.matmul %79, %87, %cst_46 {dimension_numbers = #tpu.dot_dimension_numbers<[1], [0], [0], [1], [0, 0, 1, 1], [], []>} : vector<8x128xf32>, vector<128x128xf32>, vector<8x128xf32> -> vector<8x128xf32>
    %89 = arith.addf %86, %88 : vector<8x128xf32>
    %90 = arith.negf %89 : vector<8x128xf32>
    %91 = math.exp %90 : vector<8x128xf32>
    %cst_47 = arith.constant 1.000000e+00 : f32
    %92 = vector.broadcast %cst_47 : f32 to vector<8x128xf32>
    %93 = arith.addf %92, %91 : vector<8x128xf32>
    %94 = arith.divf %92, %93 : vector<8x128xf32>
    %cst_48 = arith.constant 9.800000e-01 : f32
    %95 = vector.broadcast %cst_48 : f32 to vector<8x128xf32>
    %96 = arith.mulf %79, %95 : vector<8x128xf32>
    %cst_49 = arith.constant 2.000000e-02 : f32
    %97 = vector.broadcast %cst_49 : f32 to vector<8x128xf32>
    %98 = arith.mulf %94, %97 : vector<8x128xf32>
    %99 = arith.addf %96, %98 : vector<8x128xf32>
    %100 = arith.index_cast %c4_i32 : i32 to index
    %c0_50 = arith.constant 0 : index
    %c0_51 = arith.constant 0 : index
    %101 = vector.load %arg5[%100, %c0_50, %c0_51] : memref<8x8x128xf32, #tpu.memory_space<vmem>>, vector<1x8x128xf32>
    %102 = vector.shape_cast %101 : vector<1x8x128xf32> to vector<8x128xf32>
    %103 = vector.shape_cast %99 : vector<8x128xf32> to vector<1x8x128xf32>
    tpu.vector_store %arg5[%100, %c0_50, %c0_51], %103 {strides = array<i32>} : memref<8x8x128xf32, #tpu.memory_space<vmem>>, vector<1x8x128xf32>,
    %c5_i32 = arith.constant 5 : i32
    %104 = arith.index_cast %c5_i32 : i32 to index
    %c0_52 = arith.constant 0 : index
    %c0_53 = arith.constant 0 : index
    %105 = vector.load %arg2[%104, %c0_52, %c0_53] : memref<8x8x128xf32, #tpu.memory_space<vmem>>, vector<1x8x128xf32>
    %106 = vector.shape_cast %105 : vector<1x8x128xf32> to vector<8x128xf32>
    %c0_54 = arith.constant 0 : index
    %c0_55 = arith.constant 0 : index
    %107 = vector.load %arg3[%c0_54, %c0_55] : memref<128x128xf32, #tpu.memory_space<vmem>>, vector<128x128xf32>
    %cst_56 = arith.constant dense<0.000000e+00> : vector<8x128xf32>
    %108 = tpu.matmul %99, %107, %cst_56 {dimension_numbers = #tpu.dot_dimension_numbers<[1], [0], [0], [1], [0, 0, 1, 1], [], []>} : vector<8x128xf32>, vector<128x128xf32>, vector<8x128xf32> -> vector<8x128xf32>
    %109 = arith.addf %106, %108 : vector<8x128xf32>
    %110 = arith.negf %109 : vector<8x128xf32>
    %111 = math.exp %110 : vector<8x128xf32>
    %cst_57 = arith.constant 1.000000e+00 : f32
    %112 = vector.broadcast %cst_57 : f32 to vector<8x128xf32>
    %113 = arith.addf %112, %111 : vector<8x128xf32>
    %114 = arith.divf %112, %113 : vector<8x128xf32>
    %cst_58 = arith.constant 9.800000e-01 : f32
    %115 = vector.broadcast %cst_58 : f32 to vector<8x128xf32>
    %116 = arith.mulf %99, %115 : vector<8x128xf32>
    %cst_59 = arith.constant 2.000000e-02 : f32
    %117 = vector.broadcast %cst_59 : f32 to vector<8x128xf32>
    %118 = arith.mulf %114, %117 : vector<8x128xf32>
    %119 = arith.addf %116, %118 : vector<8x128xf32>
    %120 = arith.index_cast %c5_i32 : i32 to index
    %c0_60 = arith.constant 0 : index
    %c0_61 = arith.constant 0 : index
    %121 = vector.load %arg5[%120, %c0_60, %c0_61] : memref<8x8x128xf32, #tpu.memory_space<vmem>>, vector<1x8x128xf32>
    %122 = vector.shape_cast %121 : vector<1x8x128xf32> to vector<8x128xf32>
    %123 = vector.shape_cast %119 : vector<8x128xf32> to vector<1x8x128xf32>
    tpu.vector_store %arg5[%120, %c0_60, %c0_61], %123 {strides = array<i32>} : memref<8x8x128xf32, #tpu.memory_space<vmem>>, vector<1x8x128xf32>,
    %c6_i32 = arith.constant 6 : i32
    %124 = arith.index_cast %c6_i32 : i32 to index
    %c0_62 = arith.constant 0 : index
    %c0_63 = arith.constant 0 : index
    %125 = vector.load %arg2[%124, %c0_62, %c0_63] : memref<8x8x128xf32, #tpu.memory_space<vmem>>, vector<1x8x128xf32>
    %126 = vector.shape_cast %125 : vector<1x8x128xf32> to vector<8x128xf32>
    %c0_64 = arith.constant 0 : index
    %c0_65 = arith.constant 0 : index
    %127 = vector.load %arg3[%c0_64, %c0_65] : memref<128x128xf32, #tpu.memory_space<vmem>>, vector<128x128xf32>
    %cst_66 = arith.constant dense<0.000000e+00> : vector<8x128xf32>
    %128 = tpu.matmul %119, %127, %cst_66 {dimension_numbers = #tpu.dot_dimension_numbers<[1], [0], [0], [1], [0, 0, 1, 1], [], []>} : vector<8x128xf32>, vector<128x128xf32>, vector<8x128xf32> -> vector<8x128xf32>
    %129 = arith.addf %126, %128 : vector<8x128xf32>
    %130 = arith.negf %129 : vector<8x128xf32>
    %131 = math.exp %130 : vector<8x128xf32>
    %cst_67 = arith.constant 1.000000e+00 : f32
    %132 = vector.broadcast %cst_67 : f32 to vector<8x128xf32>
    %133 = arith.addf %132, %131 : vector<8x128xf32>
    %134 = arith.divf %132, %133 : vector<8x128xf32>
    %cst_68 = arith.constant 9.800000e-01 : f32
    %135 = vector.broadcast %cst_68 : f32 to vector<8x128xf32>
    %136 = arith.mulf %119, %135 : vector<8x128xf32>
    %cst_69 = arith.constant 2.000000e-02 : f32
    %137 = vector.broadcast %cst_69 : f32 to vector<8x128xf32>
    %138 = arith.mulf %134, %137 : vector<8x128xf32>
    %139 = arith.addf %136, %138 : vector<8x128xf32>
    %140 = arith.index_cast %c6_i32 : i32 to index
    %c0_70 = arith.constant 0 : index
    %c0_71 = arith.constant 0 : index
    %141 = vector.load %arg5[%140, %c0_70, %c0_71] : memref<8x8x128xf32, #tpu.memory_space<vmem>>, vector<1x8x128xf32>
    %142 = vector.shape_cast %141 : vector<1x8x128xf32> to vector<8x128xf32>
    %143 = vector.shape_cast %139 : vector<8x128xf32> to vector<1x8x128xf32>
    tpu.vector_store %arg5[%140, %c0_70, %c0_71], %143 {strides = array<i32>} : memref<8x8x128xf32, #tpu.memory_space<vmem>>, vector<1x8x128xf32>,
    %c7_i32 = arith.constant 7 : i32
    %144 = arith.index_cast %c7_i32 : i32 to index
    %c0_72 = arith.constant 0 : index
    %c0_73 = arith.constant 0 : index
    %145 = vector.load %arg2[%144, %c0_72, %c0_73] : memref<8x8x128xf32, #tpu.memory_space<vmem>>, vector<1x8x128xf32>
    %146 = vector.shape_cast %145 : vector<1x8x128xf32> to vector<8x128xf32>
    %c0_74 = arith.constant 0 : index
    %c0_75 = arith.constant 0 : index
    %147 = vector.load %arg3[%c0_74, %c0_75] : memref<128x128xf32, #tpu.memory_space<vmem>>, vector<128x128xf32>
    %cst_76 = arith.constant dense<0.000000e+00> : vector<8x128xf32>
    %148 = tpu.matmul %139, %147, %cst_76 {dimension_numbers = #tpu.dot_dimension_numbers<[1], [0], [0], [1], [0, 0, 1, 1], [], []>} : vector<8x128xf32>, vector<128x128xf32>, vector<8x128xf32> -> vector<8x128xf32>
    %149 = arith.addf %146, %148 : vector<8x128xf32>
    %150 = arith.negf %149 : vector<8x128xf32>
    %151 = math.exp %150 : vector<8x128xf32>
    %cst_77 = arith.constant 1.000000e+00 : f32
    %152 = vector.broadcast %cst_77 : f32 to vector<8x128xf32>
    %153 = arith.addf %152, %151 : vector<8x128xf32>
    %154 = arith.divf %152, %153 : vector<8x128xf32>
    %cst_78 = arith.constant 9.800000e-01 : f32
    %155 = vector.broadcast %cst_78 : f32 to vector<8x128xf32>
    %156 = arith.mulf %139, %155 : vector<8x128xf32>
    %cst_79 = arith.constant 2.000000e-02 : f32
    %157 = vector.broadcast %cst_79 : f32 to vector<8x128xf32>
    %158 = arith.mulf %154, %157 : vector<8x128xf32>
    %159 = arith.addf %156, %158 : vector<8x128xf32>
    %160 = arith.index_cast %c7_i32 : i32 to index
    %c0_80 = arith.constant 0 : index
    %c0_81 = arith.constant 0 : index
    %161 = vector.load %arg5[%160, %c0_80, %c0_81] : memref<8x8x128xf32, #tpu.memory_space<vmem>>, vector<1x8x128xf32>
    %162 = vector.shape_cast %161 : vector<1x8x128xf32> to vector<8x128xf32>
    %163 = vector.shape_cast %159 : vector<8x128xf32> to vector<1x8x128xf32>
    tpu.vector_store %arg5[%160, %c0_80, %c0_81], %163 {strides = array<i32>} : memref<8x8x128xf32, #tpu.memory_space<vmem>>, vector<1x8x128xf32>,
    %c8_i32 = arith.constant 8 : i32
    %c0_82 = arith.constant 0 : index
    %c0_83 = arith.constant 0 : index
    %164 = vector.load %arg6[%c0_82, %c0_83] : memref<8x128xf32, #tpu.memory_space<vmem>>, vector<8x128xf32>
    tpu.vector_store %arg6[%c0_82, %c0_83], %159 {strides = array<i32>} : memref<8x128xf32, #tpu.memory_space<vmem>>, vector<8x128xf32>,
    return
  }
  func.func @transform_0(%arg0: i32, %arg1: i32) -> (i32, i32, i32) {
    %c0_i32 = arith.constant 0 : i32
    %c0_i32_0 = arith.constant 0 : i32
    return %arg1, %arg0, %c0_i32 : i32, i32, i32
  }
  func.func @transform_1(%arg0: i32, %arg1: i32) -> (i32, i32) {
    %c0_i32 = arith.constant 0 : i32
    %c0_i32_0 = arith.constant 0 : i32
    %c0_i32_1 = arith.constant 0 : i32
    return %c0_i32, %c0_i32_0 : i32, i32
  }
  func.func @transform_2(%arg0: i32, %arg1: i32) -> (i32, i32) {
    %c0_i32 = arith.constant 0 : i32
    %c0_i32_0 = arith.constant 0 : i32
    return %arg0, %c0_i32 : i32, i32
  }
  func.func @transform_3(%arg0: i32, %arg1: i32) -> (i32, i32, i32) {
    %c0_i32 = arith.constant 0 : i32
    %c0_i32_0 = arith.constant 0 : i32
    return %arg1, %arg0, %c0_i32 : i32, i32, i32
  }
}

</mosaic_0001>

<llo_original>
// kernel: tpu_custom_call.1
$region0: #{tpu_custom_call.1}
  #allocation0 [shape = 'u32[]', space=smem, size = 0x4, offset = 0x4, fixed_abs, tag = 'smem constant byte address 0x4 - core index']
  #allocation1 [shape = 'u32[144,128]{1,0:T(1,128)}', space=vmem, size = 0x12000, scoped, tag = 'internal scratch']
  #allocation2 [shape = 'f32[8,128]{1,0:T(8,128)}', space=vmem, size = 0x1000, scoped, tag = 'scratch operand']
  %s0 = inlined_call_operand.hbm [shape: f32[8,8,128], index: 0, kind: input, shape index: {}]
  %s1 = inlined_call_operand.hbm [shape: f32[128,128], index: 1, kind: input, shape index: {}]
  %s2 = inlined_call_operand.hbm [shape: f32[8,128], index: 2, kind: input, shape index: {}]
  %s3 = inlined_call_operand.hbm [shape: f32[8,8,128], index: 3, kind: output, shape index: {}]
  %s4 = sld [smem:[#allocation0]]
  $region38: #{tpu_custom_call.1} parent=0
    _
  %s6 = ssub.s32 1, %s4
  %s7 = scalar_select 0, %s6, %s4
  $region1: #{tpu_custom_call.1} parent=0
    #allocation3 [shape = 'u8[32768]{0}', space=vmem, size = 0x8000, scoped, tag = 'input window, operand 0, single buffered']
    #allocation4 [shape = 's32[1]{0}', space=sflag, size = 0x4, scoped, tag = 'scoped memory for tpu_custom_call.1']
    #allocation5 [shape = 's32[1]{0}', space=sflag, size = 0x4, scoped, tag = 'scoped memory for tpu_custom_call.1']
    #allocation6 [shape = 'u8[65536]{0}', space=vmem, size = 0x10000, scoped, tag = 'input window, operand 1, single buffered']
    #allocation7 [shape = 's32[1]{0}', space=sflag, size = 0x4, scoped, tag = 'scoped memory for tpu_custom_call.1']
    #allocation8 [shape = 'u8[4096]{0}', space=vmem, size = 0x1000, scoped, tag = 'input window, operand 2, single buffered']
    #allocation9 [shape = 'u8[32768]{0}', space=vmem, size = 0x8000, scoped, tag = 'output window, operand 0, single buffered']
    %8 = vsyncpa [#allocation4], 0
    %9 = vsyncpa [#allocation7], 0
    %10 = vsyncpa [#allocation5], 0
    // Predicated region
    $region2: #{tpu_custom_call.1} parent=1 // pred_check
      _
    $region3: #{tpu_custom_call.1} parent=1 // pred_check_branch
      %12 = sbr.rel (0) target = $region5
    $region4: #{tpu_custom_call.1} parent=1 // pred_region
      %s14 = ssub.s32 1024, 1024
      %15 = vsyncadd [#allocation4], %s14
      %s16 = sshll.u32 [#allocation3], 4
      %s17 = int_to_ptr.vmem [resolvable:$true] %s16
      %22 = dma.hbm_to_vmem [thread:$0]  %s0, 1024, %s17, [#allocation4], 128, 128, 8
    $region5: #{tpu_custom_call.1} parent=1 // pred_fallthru
      _
    // Predicated region
    $region6: #{tpu_custom_call.1} parent=1 // pred_check
      _
    $region7: #{tpu_custom_call.1} parent=1 // pred_check_branch
      %24 = sbr.rel (0) target = $region9
    $region8: #{tpu_custom_call.1} parent=1 // pred_region
      %s26 = ssub.s32 2048, 2048
      %27 = vsyncadd [#allocation7], %s26
      %s28 = sshll.u32 [#allocation6], 4
      %s29 = int_to_ptr.vmem [resolvable:$true] %s28
      %34 = dma.hbm_to_vmem [thread:$0]  %s1, 2048, %s29, [#allocation7], 128, 128, 8
    $region9: #{tpu_custom_call.1} parent=1 // pred_fallthru
      _
    // Predicated region
    $region10: #{tpu_custom_call.1} parent=1 // pred_check
      _
    $region11: #{tpu_custom_call.1} parent=1 // pred_check_branch
      %36 = sbr.rel (0) target = $region13
    $region12: #{tpu_custom_call.1} parent=1 // pred_region
      %s38 = ssub.s32 128, 128
      %39 = vsyncadd [#allocation7], %s38
      %s41 = sshll.u32 [#allocation8], 4
      %s42 = int_to_ptr.vmem [resolvable:$true] %s41
      %44 = dma.hbm_to_vmem [thread:$0]  %s2, 128, %s42, [#allocation7]
    $region13: #{tpu_custom_call.1} parent=1 // pred_fallthru
      _
    // Predicated region
    $region14: #{tpu_custom_call.1} parent=1 // pred_check
      _
    $region15: #{tpu_custom_call.1} parent=1 // pred_check_branch
      %46 = sbr.rel (0) target = $region17
    $region16: #{tpu_custom_call.1} parent=1 // pred_region
      %47 = dma.done [#allocation4], 1024
    $region17: #{tpu_custom_call.1} parent=1 // pred_fallthru
      _
    // Predicated region
    $region18: #{tpu_custom_call.1} parent=1 // pred_check
      _
    $region19: #{tpu_custom_call.1} parent=1 // pred_check_branch
      %49 = sbr.rel (0) target = $region21
    $region20: #{tpu_custom_call.1} parent=1 // pred_region
      %50 = dma.done [#allocation7], 2048
    $region21: #{tpu_custom_call.1} parent=1 // pred_fallthru
      _
    // Predicated region
    $region22: #{tpu_custom_call.1} parent=1 // pred_check
      _
    $region23: #{tpu_custom_call.1} parent=1 // pred_check_branch
      %52 = sbr.rel (0) target = $region25
    $region24: #{tpu_custom_call.1} parent=1 // pred_region
      %53 = dma.done [#allocation7], 128
    $region25: #{tpu_custom_call.1} parent=1 // pred_fallthru
      _
    %p54 = scmp.eq.s32.totalorder 0, 0
    // Predicated region
    $region26: #{tpu_custom_call.1} parent=1 // pred_check
      %p55 = pneg %p54
    $region27: #{tpu_custom_call.1} parent=1 // pred_check_branch
      %57 = sbr.rel (%p55) target = $region29
    $region28: #{tpu_custom_call.1} parent=1 // pred_region
      %v58 = vld [vmem:[#allocation8] sm:$0xff]
      %59 = vst [vmem:[#allocation2] sm:$0xff] %v58
    $region29: #{tpu_custom_call.1} parent=1 // pred_fallthru
      _
    %v60 = vld [vmem:[#allocation2] sm:$0xff]
    %v61 = vld [vmem:[#allocation3] sm:$0xff]
    %v62 = vld [vmem:[#allocation6] sm:$0xff]
    %v63 = vld [vmem:[#allocation6 + $0x8] sm:$0xff]
    %v64 = vld [vmem:[#allocation6 + $0x10] sm:$0xff]
    %v65 = vld [vmem:[#allocation6 + $0x18] sm:$0xff]
    %v66 = vld [vmem:[#allocation6 + $0x20] sm:$0xff]
    %v67 = vld [vmem:[#allocation6 + $0x28] sm:$0xff]
    %v68 = vld [vmem:[#allocation6 + $0x30] sm:$0xff]
    %v69 = vld [vmem:[#allocation6 + $0x38] sm:$0xff]
    %v70 = vld [vmem:[#allocation6 + $0x40] sm:$0xff]
    %v71 = vld [vmem:[#allocation6 + $0x48] sm:$0xff]
    %v72 = vld [vmem:[#allocation6 + $0x50] sm:$0xff]
    %v73 = vld [vmem:[#allocation6 + $0x58] sm:$0xff]
    %v74 = vld [vmem:[#allocation6 + $0x60] sm:$0xff]
    %v75 = vld [vmem:[#allocation6 + $0x68] sm:$0xff]
    %v76 = vld [vmem:[#allocation6 + $0x70] sm:$0xff]
    %v77 = vld [vmem:[#allocation6 + $0x78] sm:$0xff]
    %78 = vmatprep.subr.mxu0 0.0
    %79 = vmatpush1.msra.mxu0 %v62
    %80 = vmatprep.subr.mxu0 0.0
    %81 = vmatpush1.msra.mxu0 %v63
    %82 = vmatprep.subr.mxu0 0.0
    %83 = vmatpush1.msra.mxu0 %v64
    %84 = vmatprep.subr.mxu0 0.0
    %85 = vmatpush1.msra.mxu0 %v65
    %86 = vmatprep.subr.mxu0 0.0
    %87 = vmatpush1.msra.mxu0 %v66
    %88 = vmatprep.subr.mxu0 0.0
    %89 = vmatpush1.msra.mxu0 %v67
    %90 = vmatprep.subr.mxu0 0.0
    %91 = vmatpush1.msra.mxu0 %v68
    %92 = vmatprep.subr.mxu0 0.0
    %93 = vmatpush1.msra.mxu0 %v69
    %94 = vmatprep.subr.mxu0 0.0
    %95 = vmatpush1.msra.mxu0 %v70
    %96 = vmatprep.subr.mxu0 0.0
    %97 = vmatpush1.msra.mxu0 %v71
    %98 = vmatprep.subr.mxu0 0.0
    %99 = vmatpush1.msra.mxu0 %v72
    %100 = vmatprep.subr.mxu0 0.0
    %101 = vmatpush1.msra.mxu0 %v73
    %102 = vmatprep.subr.mxu0 0.0
    %103 = vmatpush1.msra.mxu0 %v74
    %104 = vmatprep.subr.mxu0 0.0
    %105 = vmatpush1.msra.mxu0 %v75
    %106 = vmatprep.subr.mxu0 0.0
    %107 = vmatpush1.msra.mxu0 %v76
    %108 = vmatprep.subr.mxu0 0.0
    %109 = vmatpush1.msra.mxu0 %v77
    %110 = vmatprep.subr.mxu0 0.0
    %111 = vmatpush1.msra.mxu0 0.0
    %112 = vmatprep.subr.mxu0 0.0
    %113 = vmatpush1.msra.mxu0 0.0
    %114 = vmatprep.subr.mxu0 0.0
    %115 = vmatpush1.msra.mxu0 0.0
    %116 = vmatprep.subr.mxu0 0.0
    %117 = vmatpush1.msra.mxu0 0.0
    %118 = vmatprep.subr.mxu0 0.0
    %119 = vmatpush1.msra.mxu0 0.0
    %120 = vmatprep.subr.mxu0 0.0
    %121 = vmatpush1.msra.mxu0 0.0
    %122 = vmatprep.subr.mxu0 0.0
    %123 = vmatpush1.msra.mxu0 0.0
    %124 = vmatprep.subr.mxu0 0.0
    %125 = vmatpush1.msra.mxu0 0.0
    %126 = vmatprep.subr.mxu0 0.0
    %127 = vmatpush1.msra.mxu0 0.0
    %128 = vmatprep.subr.mxu0 0.0
    %129 = vmatpush1.msra.mxu0 0.0
    %130 = vmatprep.subr.mxu0 0.0
    %131 = vmatpush1.msra.mxu0 0.0
    %132 = vmatprep.subr.mxu0 0.0
    %133 = vmatpush1.msra.mxu0 0.0
    %134 = vmatprep.subr.mxu0 0.0
    %135 = vmatpush1.msra.mxu0 0.0
    %136 = vmatprep.subr.mxu0 0.0
    %137 = vmatpush1.msra.mxu0 0.0
    %138 = vmatprep.subr.mxu0 0.0
    %139 = vmatpush1.msra.mxu0 0.0
    %140 = vmatprep.subr.mxu0 0.0
    %141 = vmatpush1.msra.mxu0 0.0
    %142 = vmatprep.mubr.f32.mxu0 0.0
    %143 = vmatmul.mubr.f32.gmra.mrb[0].mxu0 %v60
    %v144 = vpop.f32.mrb[0].mxu0
    %v145 = vadd.f32 0.0, %v144
    %v146 = vpop.f32.mrb[0].mxu0
    %147 = vdwg.mxu0
    %v148 = vadd.f32 %v61, %v145
    %v149 = vxor.u32 %v148, 2147483648
    %v150 = vmul.f32 %v149, 1.442695
    %v151 = vpow.pop %v150
    %v152 = vadd.f32 %v151, 1.0
    %v153 = vrcp.pop %v152
    %v154 = vmul.f32 1.0, %v153
    %v155 = vmul.f32 %v60, 0.98
    %v156 = vmul.f32 %v154, 0.02
    %v157 = vadd.f32 %v155, %v156
    %158 = vst [vmem:[#allocation9] sm:$0xff] %v157
    %s159 = scalar_lea.vmem [#allocation3], 8
    %v160 = vld [vmem:[%s159] sm:$0xff]
    %v161 = vld [vmem:[#allocation6] sm:$0xff]
    %v162 = vld [vmem:[#allocation6 + $0x8] sm:$0xff]
    %v163 = vld [vmem:[#allocation6 + $0x10] sm:$0xff]
    %v164 = vld [vmem:[#allocation6 + $0x18] sm:$0xff]
    %v165 = vld [vmem:[#allocation6 + $0x20] sm:$0xff]
    %v166 = vld [vmem:[#allocation6 + $0x28] sm:$0xff]
    %v167 = vld [vmem:[#allocation6 + $0x30] sm:$0xff]
    %v168 = vld [vmem:[#allocation6 + $0x38] sm:$0xff]
    %v169 = vld [vmem:[#allocation6 + $0x40] sm:$0xff]
    %v170 = vld [vmem:[#allocation6 + $0x48] sm:$0xff]
    %v171 = vld [vmem:[#allocation6 + $0x50] sm:$0xff]
    %v172 = vld [vmem:[#allocation6 + $0x58] sm:$0xff]
    %v173 = vld [vmem:[#allocation6 + $0x60] sm:$0xff]
    %v174 = vld [vmem:[#allocation6 + $0x68] sm:$0xff]
    %v175 = vld [vmem:[#allocation6 + $0x70] sm:$0xff]
    %v176 = vld [vmem:[#allocation6 + $0x78] sm:$0xff]
    %177 = vmatprep.subr.mxu0 0.0
    %178 = vmatpush1.msra.mxu0 %v161
    %179 = vmatprep.subr.mxu0 0.0
    %180 = vmatpush1.msra.mxu0 %v162
    %181 = vmatprep.subr.mxu0 0.0
    %182 = vmatpush1.msra.mxu0 %v163
    %183 = vmatprep.subr.mxu0 0.0
    %184 = vmatpush1.msra.mxu0 %v164
    %185 = vmatprep.subr.mxu0 0.0
    %186 = vmatpush1.msra.mxu0 %v165
    %187 = vmatprep.subr.mxu0 0.0
    %188 = vmatpush1.msra.mxu0 %v166
    %189 = vmatprep.subr.mxu0 0.0
    %190 = vmatpush1.msra.mxu0 %v167
    %191 = vmatprep.subr.mxu0 0.0
    %192 = vmatpush1.msra.mxu0 %v168
    %193 = vmatprep.subr.mxu0 0.0
    %194 = vmatpush1.msra.mxu0 %v169
    %195 = vmatprep.subr.mxu0 0.0
    %196 = vmatpush1.msra.mxu0 %v170
    %197 = vmatprep.subr.mxu0 0.0
    %198 = vmatpush1.msra.mxu0 %v171
    %199 = vmatprep.subr.mxu0 0.0
    %200 = vmatpush1.msra.mxu0 %v172
    %201 = vmatprep.subr.mxu0 0.0
    %202 = vmatpush1.msra.mxu0 %v173
    %203 = vmatprep.subr.mxu0 0.0
    %204 = vmatpush1.msra.mxu0 %v174
    %205 = vmatprep.subr.mxu0 0.0
    %206 = vmatpush1.msra.mxu0 %v175
    %207 = vmatprep.subr.mxu0 0.0
    %208 = vmatpush1.msra.mxu0 %v176
    %209 = vmatprep.subr.mxu0 0.0
    %210 = vmatpush1.msra.mxu0 0.0
    %211 = vmatprep.subr.mxu0 0.0
    %212 = vmatpush1.msra.mxu0 0.0
    %213 = vmatprep.subr.mxu0 0.0
    %214 = vmatpush1.msra.mxu0 0.0
    %215 = vmatprep.subr.mxu0 0.0
    %216 = vmatpush1.msra.mxu0 0.0
    %217 = vmatprep.subr.mxu0 0.0
    %218 = vmatpush1.msra.mxu0 0.0
    %219 = vmatprep.subr.mxu0 0.0
    %220 = vmatpush1.msra.mxu0 0.0
    %221 = vmatprep.subr.mxu0 0.0
    %222 = vmatpush1.msra.mxu0 0.0
    %223 = vmatprep.subr.mxu0 0.0
    %224 = vmatpush1.msra.mxu0 0.0
    %225 = vmatprep.subr.mxu0 0.0
    %226 = vmatpush1.msra.mxu0 0.0
    %227 = vmatprep.subr.mxu0 0.0
    %228 = vmatpush1.msra.mxu0 0.0
    %229 = vmatprep.subr.mxu0 0.0
    %230 = vmatpush1.msra.mxu0 0.0
    %231 = vmatprep.subr.mxu0 0.0
    %232 = vmatpush1.msra.mxu0 0.0
    %233 = vmatprep.subr.mxu0 0.0
    %234 = vmatpush1.msra.mxu0 0.0
    %235 = vmatprep.subr.mxu0 0.0
    %236 = vmatpush1.msra.mxu0 0.0
    %237 = vmatprep.subr.mxu0 0.0
    %238 = vmatpush1.msra.mxu0 0.0
    %239 = vmatprep.subr.mxu0 0.0
    %240 = vmatpush1.msra.mxu0 0.0
    %241 = vmatprep.mubr.f32.mxu0 0.0
    %242 = vmatmul.mubr.f32.gmra.mrb[0].mxu0 %v157
    %v243 = vpop.f32.mrb[0].mxu0
    %v244 = vadd.f32 0.0, %v243
    %v245 = vpop.f32.mrb[0].mxu0
    %246 = vdwg.mxu0
    %v247 = vadd.f32 %v160, %v244
    %v248 = vxor.u32 %v247, 2147483648
    %v249 = vmul.f32 %v248, 1.442695
    %v250 = vpow.pop %v249
    %v251 = vadd.f32 %v250, 1.0
    %v252 = vrcp.pop %v251
    %v253 = vmul.f32 1.0, %v252
    %v254 = vmul.f32 %v157, 0.98
    %v255 = vmul.f32 %v253, 0.02
    %v256 = vadd.f32 %v254, %v255
    %s257 = scalar_lea.vmem [#allocation9], 8
    %258 = vst [vmem:[%s257] sm:$0xff] %v256
    %s259 = scalar_lea.vmem [#allocation3], 16
    %v260 = vld [vmem:[%s259] sm:$0xff]
    %v261 = vld [vmem:[#allocation6] sm:$0xff]
    %v262 = vld [vmem:[#allocation6 + $0x8] sm:$0xff]
    %v263 = vld [vmem:[#allocation6 + $0x10] sm:$0xff]
    %v264 = vld [vmem:[#allocation6 + $0x18] sm:$0xff]
    %v265 = vld [vmem:[#allocation6 + $0x20] sm:$0xff]
    %v266 = vld [vmem:[#allocation6 + $0x28] sm:$0xff]
    %v267 = vld [vmem:[#allocation6 + $0x30] sm:$0xff]
    %v268 = vld [vmem:[#allocation6 + $0x38] sm:$0xff]
    %v269 = vld [vmem:[#allocation6 + $0x40] sm:$0xff]
    %v270 = vld [vmem:[#allocation6 + $0x48] sm:$0xff]
    %v271 = vld [vmem:[#allocation6 + $0x50] sm:$0xff]
    %v272 = vld [vmem:[#allocation6 + $0x58] sm:$0xff]
    %v273 = vld [vmem:[#allocation6 + $0x60] sm:$0xff]
    %v274 = vld [vmem:[#allocation6 + $0x68] sm:$0xff]
    %v275 = vld [vmem:[#allocation6 + $0x70] sm:$0xff]
    %v276 = vld [vmem:[#allocation6 + $0x78] sm:$0xff]
    %277 = vmatprep.subr.mxu0 0.0
    %278 = vmatpush1.msra.mxu0 %v261
    %279 = vmatprep.subr.mxu0 0.0
    %280 = vmatpush1.msra.mxu0 %v262
    %281 = vmatprep.subr.mxu0 0.0
    %282 = vmatpush1.msra.mxu0 %v263
    %283 = vmatprep.subr.mxu0 0.0
    %284 = vmatpush1.msra.mxu0 %v264
    %285 = vmatprep.subr.mxu0 0.0
    %286 = vmatpush1.msra.mxu0 %v265
    %287 = vmatprep.subr.mxu0 0.0
    %288 = vmatpush1.msra.mxu0 %v266
    %289 = vmatprep.subr.mxu0 0.0
    %290 = vmatpush1.msra.mxu0 %v267
    %291 = vmatprep.subr.mxu0 0.0
    %292 = vmatpush1.msra.mxu0 %v268
    %293 = vmatprep.subr.mxu0 0.0
    %294 = vmatpush1.msra.mxu0 %v269
    %295 = vmatprep.subr.mxu0 0.0
    %296 = vmatpush1.msra.mxu0 %v270
    %297 = vmatprep.subr.mxu0 0.0
    %298 = vmatpush1.msra.mxu0 %v271
    %299 = vmatprep.subr.mxu0 0.0
    %300 = vmatpush1.msra.mxu0 %v272
    %301 = vmatprep.subr.mxu0 0.0
    %302 = vmatpush1.msra.mxu0 %v273
    %303 = vmatprep.subr.mxu0 0.0
    %304 = vmatpush1.msra.mxu0 %v274
    %305 = vmatprep.subr.mxu0 0.0
    %306 = vmatpush1.msra.mxu0 %v275
    %307 = vmatprep.subr.mxu0 0.0
    %308 = vmatpush1.msra.mxu0 %v276
    %309 = vmatprep.subr.mxu0 0.0
    %310 = vmatpush1.msra.mxu0 0.0
    %311 = vmatprep.subr.mxu0 0.0
    %312 = vmatpush1.msra.mxu0 0.0
    %313 = vmatprep.subr.mxu0 0.0
    %314 = vmatpush1.msra.mxu0 0.0
    %315 = vmatprep.subr.mxu0 0.0
    %316 = vmatpush1.msra.mxu0 0.0
    %317 = vmatprep.subr.mxu0 0.0
    %318 = vmatpush1.msra.mxu0 0.0
    %319 = vmatprep.subr.mxu0 0.0
    %320 = vmatpush1.msra.mxu0 0.0
    %321 = vmatprep.subr.mxu0 0.0
    %322 = vmatpush1.msra.mxu0 0.0
    %323 = vmatprep.subr.mxu0 0.0
    %324 = vmatpush1.msra.mxu0 0.0
    %325 = vmatprep.subr.mxu0 0.0
    %326 = vmatpush1.msra.mxu0 0.0
    %327 = vmatprep.subr.mxu0 0.0
    %328 = vmatpush1.msra.mxu0 0.0
    %329 = vmatprep.subr.mxu0 0.0
    %330 = vmatpush1.msra.mxu0 0.0
    %331 = vmatprep.subr.mxu0 0.0
    %332 = vmatpush1.msra.mxu0 0.0
    %333 = vmatprep.subr.mxu0 0.0
    %334 = vmatpush1.msra.mxu0 0.0
    %335 = vmatprep.subr.mxu0 0.0
    %336 = vmatpush1.msra.mxu0 0.0
    %337 = vmatprep.subr.mxu0 0.0
    %338 = vmatpush1.msra.mxu0 0.0
    %339 = vmatprep.subr.mxu0 0.0
    %340 = vmatpush1.msra.mxu0 0.0
    %341 = vmatprep.mubr.f32.mxu0 0.0
    %342 = vmatmul.mubr.f32.gmra.mrb[0].mxu0 %v256
    %v343 = vpop.f32.mrb[0].mxu0
    %v344 = vadd.f32 0.0, %v343
    %v345 = vpop.f32.mrb[0].mxu0
    %346 = vdwg.mxu0
    %v347 = vadd.f32 %v260, %v344
    %v348 = vxor.u32 %v347, 2147483648
    %v349 = vmul.f32 %v348, 1.442695
    %v350 = vpow.pop %v349
    %v351 = vadd.f32 %v350, 1.0
    %v352 = vrcp.pop %v351
    %v353 = vmul.f32 1.0, %v352
    %v354 = vmul.f32 %v256, 0.98
    %v355 = vmul.f32 %v353, 0.02
    %v356 = vadd.f32 %v354, %v355
    %s357 = scalar_lea.vmem [#allocation9], 16
    %358 = vst [vmem:[%s357] sm:$0xff] %v356
    %s359 = scalar_lea.vmem [#allocation3], 24
    %v360 = vld [vmem:[%s359] sm:$0xff]
    %v361 = vld [vmem:[#allocation6] sm:$0xff]
    %v362 = vld [vmem:[#allocation6 + $0x8] sm:$0xff]
    %v363 = vld [vmem:[#allocation6 + $0x10] sm:$0xff]
    %v364 = vld [vmem:[#allocation6 + $0x18] sm:$0xff]
    %v365 = vld [vmem:[#allocation6 + $0x20] sm:$0xff]
    %v366 = vld [vmem:[#allocation6 + $0x28] sm:$0xff]
    %v367 = vld [vmem:[#allocation6 + $0x30] sm:$0xff]
    %v368 = vld [vmem:[#allocation6 + $0x38] sm:$0xff]
    %v369 = vld [vmem:[#allocation6 + $0x40] sm:$0xff]
    %v370 = vld [vmem:[#allocation6 + $0x48] sm:$0xff]
    %v371 = vld [vmem:[#allocation6 + $0x50] sm:$0xff]
    %v372 = vld [vmem:[#allocation6 + $0x58] sm:$0xff]
    %v373 = vld [vmem:[#allocation6 + $0x60] sm:$0xff]
    %v374 = vld [vmem:[#allocation6 + $0x68] sm:$0xff]
    %v375 = vld [vmem:[#allocation6 + $0x70] sm:$0xff]
    %v376 = vld [vmem:[#allocation6 + $0x78] sm:$0xff]
    %377 = vmatprep.subr.mxu0 0.0
    %378 = vmatpush1.msra.mxu0 %v361
    %379 = vmatprep.subr.mxu0 0.0
    %380 = vmatpush1.msra.mxu0 %v362
    %381 = vmatprep.subr.mxu0 0.0
    %382 = vmatpush1.msra.mxu0 %v363
    %383 = vmatprep.subr.mxu0 0.0
    %384 = vmatpush1.msra.mxu0 %v364
    %385 = vmatprep.subr.mxu0 0.0
    %386 = vmatpush1.msra.mxu0 %v365
    %387 = vmatprep.subr.mxu0 0.0
    %388 = vmatpush1.msra.mxu0 %v366
    %389 = vmatprep.subr.mxu0 0.0
    %390 = vmatpush1.msra.mxu0 %v367
    %391 = vmatprep.subr.mxu0 0.0
    %392 = vmatpush1.msra.mxu0 %v368
    %393 = vmatprep.subr.mxu0 0.0
    %394 = vmatpush1.msra.mxu0 %v369
    %395 = vmatprep.subr.mxu0 0.0
    %396 = vmatpush1.msra.mxu0 %v370
    %397 = vmatprep.subr.mxu0 0.0
    %398 = vmatpush1.msra.mxu0 %v371
    %399 = vmatprep.subr.mxu0 0.0
    %400 = vmatpush1.msra.mxu0 %v372
    %401 = vmatprep.subr.mxu0 0.0
    %402 = vmatpush1.msra.mxu0 %v373
    %403 = vmatprep.subr.mxu0 0.0
    %404 = vmatpush1.msra.mxu0 %v374
    %405 = vmatprep.subr.mxu0 0.0
    %406 = vmatpush1.msra.mxu0 %v375
    %407 = vmatprep.subr.mxu0 0.0
    %408 = vmatpush1.msra.mxu0 %v376
    %409 = vmatprep.subr.mxu0 0.0
    %410 = vmatpush1.msra.mxu0 0.0
    %411 = vmatprep.subr.mxu0 0.0
    %412 = vmatpush1.msra.mxu0 0.0
    %413 = vmatprep.subr.mxu0 0.0
    %414 = vmatpush1.msra.mxu0 0.0
    %415 = vmatprep.subr.mxu0 0.0
    %416 = vmatpush1.msra.mxu0 0.0
    %417 = vmatprep.subr.mxu0 0.0
    %418 = vmatpush1.msra.mxu0 0.0
    %419 = vmatprep.subr.mxu0 0.0
    %420 = vmatpush1.msra.mxu0 0.0
    %421 = vmatprep.subr.mxu0 0.0
    %422 = vmatpush1.msra.mxu0 0.0
    %423 = vmatprep.subr.mxu0 0.0
    %424 = vmatpush1.msra.mxu0 0.0
    %425 = vmatprep.subr.mxu0 0.0
    %426 = vmatpush1.msra.mxu0 0.0
    %427 = vmatprep.subr.mxu0 0.0
    %428 = vmatpush1.msra.mxu0 0.0
    %429 = vmatprep.subr.mxu0 0.0
    %430 = vmatpush1.msra.mxu0 0.0
    %431 = vmatprep.subr.mxu0 0.0
    %432 = vmatpush1.msra.mxu0 0.0
    %433 = vmatprep.subr.mxu0 0.0
    %434 = vmatpush1.msra.mxu0 0.0
    %435 = vmatprep.subr.mxu0 0.0
    %436 = vmatpush1.msra.mxu0 0.0
    %437 = vmatprep.subr.mxu0 0.0
    %438 = vmatpush1.msra.mxu0 0.0
    %439 = vmatprep.subr.mxu0 0.0
    %440 = vmatpush1.msra.mxu0 0.0
    %441 = vmatprep.mubr.f32.mxu0 0.0
    %442 = vmatmul.mubr.f32.gmra.mrb[0].mxu0 %v356
    %v443 = vpop.f32.mrb[0].mxu0
    %v444 = vadd.f32 0.0, %v443
    %v445 = vpop.f32.mrb[0].mxu0
    %446 = vdwg.mxu0
    %v447 = vadd.f32 %v360, %v444
    %v448 = vxor.u32 %v447, 2147483648
    %v449 = vmul.f32 %v448, 1.442695
    %v450 = vpow.pop %v449
    %v451 = vadd.f32 %v450, 1.0
    %v452 = vrcp.pop %v451
    %v453 = vmul.f32 1.0, %v452
    %v454 = vmul.f32 %v356, 0.98
    %v455 = vmul.f32 %v453, 0.02
    %v456 = vadd.f32 %v454, %v455
    %s457 = scalar_lea.vmem [#allocation9], 24
    %458 = vst [vmem:[%s457] sm:$0xff] %v456
    %s459 = scalar_lea.vmem [#allocation3], 32
    %v460 = vld [vmem:[%s459] sm:$0xff]
    %v461 = vld [vmem:[#allocation6] sm:$0xff]
    %v462 = vld [vmem:[#allocation6 + $0x8] sm:$0xff]
    %v463 = vld [vmem:[#allocation6 + $0x10] sm:$0xff]
    %v464 = vld [vmem:[#allocation6 + $0x18] sm:$0xff]
    %v465 = vld [vmem:[#allocation6 + $0x20] sm:$0xff]
    %v466 = vld [vmem:[#allocation6 + $0x28] sm:$0xff]
    %v467 = vld [vmem:[#allocation6 + $0x30] sm:$0xff]
    %v468 = vld [vmem:[#allocation6 + $0x38] sm:$0xff]
    %v469 = vld [vmem:[#allocation6 + $0x40] sm:$0xff]
    %v470 = vld [vmem:[#allocation6 + $0x48] sm:$0xff]
    %v471 = vld [vmem:[#allocation6 + $0x50] sm:$0xff]
    %v472 = vld [vmem:[#allocation6 + $0x58] sm:$0xff]
    %v473 = vld [vmem:[#allocation6 + $0x60] sm:$0xff]
    %v474 = vld [vmem:[#allocation6 + $0x68] sm:$0xff]
    %v475 = vld [vmem:[#allocation6 + $0x70] sm:$0xff]
    %v476 = vld [vmem:[#allocation6 + $0x78] sm:$0xff]
    %477 = vmatprep.subr.mxu0 0.0
    %478 = vmatpush1.msra.mxu0 %v461
    %479 = vmatprep.subr.mxu0 0.0
    %480 = vmatpush1.msra.mxu0 %v462
    %481 = vmatprep.subr.mxu0 0.0
    %482 = vmatpush1.msra.mxu0 %v463
    %483 = vmatprep.subr.mxu0 0.0
    %484 = vmatpush1.msra.mxu0 %v464
    %485 = vmatprep.subr.mxu0 0.0
    %486 = vmatpush1.msra.mxu0 %v465
    %487 = vmatprep.subr.mxu0 0.0
    %488 = vmatpush1.msra.mxu0 %v466
    %489 = vmatprep.subr.mxu0 0.0
    %490 = vmatpush1.msra.mxu0 %v467
    %491 = vmatprep.subr.mxu0 0.0
    %492 = vmatpush1.msra.mxu0 %v468
    %493 = vmatprep.subr.mxu0 0.0
    %494 = vmatpush1.msra.mxu0 %v469
    %495 = vmatprep.subr.mxu0 0.0
    %496 = vmatpush1.msra.mxu0 %v470
    %497 = vmatprep.subr.mxu0 0.0
    %498 = vmatpush1.msra.mxu0 %v471
    %499 = vmatprep.subr.mxu0 0.0
    %500 = vmatpush1.msra.mxu0 %v472
    %501 = vmatprep.subr.mxu0 0.0
    %502 = vmatpush1.msra.mxu0 %v473
    %503 = vmatprep.subr.mxu0 0.0
    %504 = vmatpush1.msra.mxu0 %v474
    %505 = vmatprep.subr.mxu0 0.0
    %506 = vmatpush1.msra.mxu0 %v475
    %507 = vmatprep.subr.mxu0 0.0
    %508 = vmatpush1.msra.mxu0 %v476
    %509 = vmatprep.subr.mxu0 0.0
    %510 = vmatpush1.msra.mxu0 0.0
    %511 = vmatprep.subr.mxu0 0.0
    %512 = vmatpush1.msra.mxu0 0.0
    %513 = vmatprep.subr.mxu0 0.0
    %514 = vmatpush1.msra.mxu0 0.0
    %515 = vmatprep.subr.mxu0 0.0
    %516 = vmatpush1.msra.mxu0 0.0
    %517 = vmatprep.subr.mxu0 0.0
    %518 = vmatpush1.msra.mxu0 0.0
    %519 = vmatprep.subr.mxu0 0.0
    %520 = vmatpush1.msra.mxu0 0.0
    %521 = vmatprep.subr.mxu0 0.0
    %522 = vmatpush1.msra.mxu0 0.0
    %523 = vmatprep.subr.mxu0 0.0
    %524 = vmatpush1.msra.mxu0 0.0
    %525 = vmatprep.subr.mxu0 0.0
    %526 = vmatpush1.msra.mxu0 0.0
    %527 = vmatprep.subr.mxu0 0.0
    %528 = vmatpush1.msra.mxu0 0.0
    %529 = vmatprep.subr.mxu0 0.0
    %530 = vmatpush1.msra.mxu0 0.0
    %531 = vmatprep.subr.mxu0 0.0
    %532 = vmatpush1.msra.mxu0 0.0
    %533 = vmatprep.subr.mxu0 0.0
    %534 = vmatpush1.msra.mxu0 0.0
    %535 = vmatprep.subr.mxu0 0.0
    %536 = vmatpush1.msra.mxu0 0.0
    %537 = vmatprep.subr.mxu0 0.0
    %538 = vmatpush1.msra.mxu0 0.0
    %539 = vmatprep.subr.mxu0 0.0
    %540 = vmatpush1.msra.mxu0 0.0
    %541 = vmatprep.mubr.f32.mxu0 0.0
    %542 = vmatmul.mubr.f32.gmra.mrb[0].mxu0 %v456
    %v543 = vpop.f32.mrb[0].mxu0
    %v544 = vadd.f32 0.0, %v543
    %v545 = vpop.f32.mrb[0].mxu0
    %546 = vdwg.mxu0
    %v547 = vadd.f32 %v460, %v544
    %v548 = vxor.u32 %v547, 2147483648
    %v549 = vmul.f32 %v548, 1.442695
    %v550 = vpow.pop %v549
    %v551 = vadd.f32 %v550, 1.0
    %v552 = vrcp.pop %v551
    %v553 = vmul.f32 1.0, %v552
    %v554 = vmul.f32 %v456, 0.98
    %v555 = vmul.f32 %v553, 0.02
    %v556 = vadd.f32 %v554, %v555
    %s557 = scalar_lea.vmem [#allocation9], 32
    %558 = vst [vmem:[%s557] sm:$0xff] %v556
    %s559 = scalar_lea.vmem [#allocation3], 40
    %v560 = vld [vmem:[%s559] sm:$0xff]
    %v561 = vld [vmem:[#allocation6] sm:$0xff]
    %v562 = vld [vmem:[#allocation6 + $0x8] sm:$0xff]
    %v563 = vld [vmem:[#allocation6 + $0x10] sm:$0xff]
    %v564 = vld [vmem:[#allocation6 + $0x18] sm:$0xff]
    %v565 = vld [vmem:[#allocation6 + $0x20] sm:$0xff]
    %v566 = vld [vmem:[#allocation6 + $0x28] sm:$0xff]
    %v567 = vld [vmem:[#allocation6 + $0x30] sm:$0xff]
    %v568 = vld [vmem:[#allocation6 + $0x38] sm:$0xff]
    %v569 = vld [vmem:[#allocation6 + $0x40] sm:$0xff]
    %v570 = vld [vmem:[#allocation6 + $0x48] sm:$0xff]
    %v571 = vld [vmem:[#allocation6 + $0x50] sm:$0xff]
    %v572 = vld [vmem:[#allocation6 + $0x58] sm:$0xff]
    %v573 = vld [vmem:[#allocation6 + $0x60] sm:$0xff]
    %v574 = vld [vmem:[#allocation6 + $0x68] sm:$0xff]
    %v575 = vld [vmem:[#allocation6 + $0x70] sm:$0xff]
    %v576 = vld [vmem:[#allocation6 + $0x78] sm:$0xff]
    %577 = vmatprep.subr.mxu0 0.0
    %578 = vmatpush1.msra.mxu0 %v561
    %579 = vmatprep.subr.mxu0 0.0
    %580 = vmatpush1.msra.mxu0 %v562
    %581 = vmatprep.subr.mxu0 0.0
    %582 = vmatpush1.msra.mxu0 %v563
    %583 = vmatprep.subr.mxu0 0.0
    %584 = vmatpush1.msra.mxu0 %v564
    %585 = vmatprep.subr.mxu0 0.0
    %586 = vmatpush1.msra.mxu0 %v565
    %587 = vmatprep.subr.mxu0 0.0
    %588 = vmatpush1.msra.mxu0 %v566
    %589 = vmatprep.subr.mxu0 0.0
    %590 = vmatpush1.msra.mxu0 %v567
    %591 = vmatprep.subr.mxu0 0.0
    %592 = vmatpush1.msra.mxu0 %v568
    %593 = vmatprep.subr.mxu0 0.0
    %594 = vmatpush1.msra.mxu0 %v569
    %595 = vmatprep.subr.mxu0 0.0
    %596 = vmatpush1.msra.mxu0 %v570
    %597 = vmatprep.subr.mxu0 0.0
    %598 = vmatpush1.msra.mxu0 %v571
    %599 = vmatprep.subr.mxu0 0.0
    %600 = vmatpush1.msra.mxu0 %v572
    %601 = vmatprep.subr.mxu0 0.0
    %602 = vmatpush1.msra.mxu0 %v573
    %603 = vmatprep.subr.mxu0 0.0
    %604 = vmatpush1.msra.mxu0 %v574
    %605 = vmatprep.subr.mxu0 0.0
    %606 = vmatpush1.msra.mxu0 %v575
    %607 = vmatprep.subr.mxu0 0.0
    %608 = vmatpush1.msra.mxu0 %v576
    %609 = vmatprep.subr.mxu0 0.0
    %610 = vmatpush1.msra.mxu0 0.0
    %611 = vmatprep.subr.mxu0 0.0
    %612 = vmatpush1.msra.mxu0 0.0
    %613 = vmatprep.subr.mxu0 0.0
    %614 = vmatpush1.msra.mxu0 0.0
    %615 = vmatprep.subr.mxu0 0.0
    %616 = vmatpush1.msra.mxu0 0.0
    %617 = vmatprep.subr.mxu0 0.0
    %618 = vmatpush1.msra.mxu0 0.0
    %619 = vmatprep.subr.mxu0 0.0
    %620 = vmatpush1.msra.mxu0 0.0
    %621 = vmatprep.subr.mxu0 0.0
    %622 = vmatpush1.msra.mxu0 0.0
    %623 = vmatprep.subr.mxu0 0.0
    %624 = vmatpush1.msra.mxu0 0.0
    %625 = vmatprep.subr.mxu0 0.0
    %626 = vmatpush1.msra.mxu0 0.0
    %627 = vmatprep.subr.mxu0 0.0
    %628 = vmatpush1.msra.mxu0 0.0
    %629 = vmatprep.subr.mxu0 0.0
    %630 = vmatpush1.msra.mxu0 0.0
    %631 = vmatprep.subr.mxu0 0.0
    %632 = vmatpush1.msra.mxu0 0.0
    %633 = vmatprep.subr.mxu0 0.0
    %634 = vmatpush1.msra.mxu0 0.0
    %635 = vmatprep.subr.mxu0 0.0
    %636 = vmatpush1.msra.mxu0 0.0
    %637 = vmatprep.subr.mxu0 0.0
    %638 = vmatpush1.msra.mxu0 0.0
    %639 = vmatprep.subr.mxu0 0.0
    %640 = vmatpush1.msra.mxu0 0.0
    %641 = vmatprep.mubr.f32.mxu0 0.0
    %642 = vmatmul.mubr.f32.gmra.mrb[0].mxu0 %v556
    %v643 = vpop.f32.mrb[0].mxu0
    %v644 = vadd.f32 0.0, %v643
    %v645 = vpop.f32.mrb[0].mxu0
    %646 = vdwg.mxu0
    %v647 = vadd.f32 %v560, %v644
    %v648 = vxor.u32 %v647, 2147483648
    %v649 = vmul.f32 %v648, 1.442695
    %v650 = vpow.pop %v649
    %v651 = vadd.f32 %v650, 1.0
    %v652 = vrcp.pop %v651
    %v653 = vmul.f32 1.0, %v652
    %v654 = vmul.f32 %v556, 0.98
    %v655 = vmul.f32 %v653, 0.02
    %v656 = vadd.f32 %v654, %v655
    %s657 = scalar_lea.vmem [#allocation9], 40
    %658 = vst [vmem:[%s657] sm:$0xff] %v656
    %s659 = scalar_lea.vmem [#allocation3], 48
    %v660 = vld [vmem:[%s659] sm:$0xff]
    %v661 = vld [vmem:[#allocation6] sm:$0xff]
    %v662 = vld [vmem:[#allocation6 + $0x8] sm:$0xff]
    %v663 = vld [vmem:[#allocation6 + $0x10] sm:$0xff]
    %v664 = vld [vmem:[#allocation6 + $0x18] sm:$0xff]
    %v665 = vld [vmem:[#allocation6 + $0x20] sm:$0xff]
    %v666 = vld [vmem:[#allocation6 + $0x28] sm:$0xff]
    %v667 = vld [vmem:[#allocation6 + $0x30] sm:$0xff]
    %v668 = vld [vmem:[#allocation6 + $0x38] sm:$0xff]
    %v669 = vld [vmem:[#allocation6 + $0x40] sm:$0xff]
    %v670 = vld [vmem:[#allocation6 + $0x48] sm:$0xff]
    %v671 = vld [vmem:[#allocation6 + $0x50] sm:$0xff]
    %v672 = vld [vmem:[#allocation6 + $0x58] sm:$0xff]
    %v673 = vld [vmem:[#allocation6 + $0x60] sm:$0xff]
    %v674 = vld [vmem:[#allocation6 + $0x68] sm:$0xff]
    %v675 = vld [vmem:[#allocation6 + $0x70] sm:$0xff]
    %v676 = vld [vmem:[#allocation6 + $0x78] sm:$0xff]
    %677 = vmatprep.subr.mxu0 0.0
    %678 = vmatpush1.msra.mxu0 %v661
    %679 = vmatprep.subr.mxu0 0.0
    %680 = vmatpush1.msra.mxu0 %v662
    %681 = vmatprep.subr.mxu0 0.0
    %682 = vmatpush1.msra.mxu0 %v663
    %683 = vmatprep.subr.mxu0 0.0
    %684 = vmatpush1.msra.mxu0 %v664
    %685 = vmatprep.subr.mxu0 0.0
    %686 = vmatpush1.msra.mxu0 %v665
    %687 = vmatprep.subr.mxu0 0.0
    %688 = vmatpush1.msra.mxu0 %v666
    %689 = vmatprep.subr.mxu0 0.0
    %690 = vmatpush1.msra.mxu0 %v667
    %691 = vmatprep.subr.mxu0 0.0
    %692 = vmatpush1.msra.mxu0 %v668
    %693 = vmatprep.subr.mxu0 0.0
    %694 = vmatpush1.msra.mxu0 %v669
    %695 = vmatprep.subr.mxu0 0.0
    %696 = vmatpush1.msra.mxu0 %v670
    %697 = vmatprep.subr.mxu0 0.0
    %698 = vmatpush1.msra.mxu0 %v671
    %699 = vmatprep.subr.mxu0 0.0
    %700 = vmatpush1.msra.mxu0 %v672
    %701 = vmatprep.subr.mxu0 0.0
    %702 = vmatpush1.msra.mxu0 %v673
    %703 = vmatprep.subr.mxu0 0.0
    %704 = vmatpush1.msra.mxu0 %v674
    %705 = vmatprep.subr.mxu0 0.0
    %706 = vmatpush1.msra.mxu0 %v675
    %707 = vmatprep.subr.mxu0 0.0
    %708 = vmatpush1.msra.mxu0 %v676
    %709 = vmatprep.subr.mxu0 0.0
    %710 = vmatpush1.msra.mxu0 0.0
    %711 = vmatprep.subr.mxu0 0.0
    %712 = vmatpush1.msra.mxu0 0.0
    %713 = vmatprep.subr.mxu0 0.0
    %714 = vmatpush1.msra.mxu0 0.0
    %715 = vmatprep.subr.mxu0 0.0
    %716 = vmatpush1.msra.mxu0 0.0
    %717 = vmatprep.subr.mxu0 0.0
    %718 = vmatpush1.msra.mxu0 0.0
    %719 = vmatprep.subr.mxu0 0.0
    %720 = vmatpush1.msra.mxu0 0.0
    %721 = vmatprep.subr.mxu0 0.0
    %722 = vmatpush1.msra.mxu0 0.0
    %723 = vmatprep.subr.mxu0 0.0
    %724 = vmatpush1.msra.mxu0 0.0
    %725 = vmatprep.subr.mxu0 0.0
    %726 = vmatpush1.msra.mxu0 0.0
    %727 = vmatprep.subr.mxu0 0.0
    %728 = vmatpush1.msra.mxu0 0.0
    %729 = vmatprep.subr.mxu0 0.0
    %730 = vmatpush1.msra.mxu0 0.0
    %731 = vmatprep.subr.mxu0 0.0
    %732 = vmatpush1.msra.mxu0 0.0
    %733 = vmatprep.subr.mxu0 0.0
    %734 = vmatpush1.msra.mxu0 0.0
    %735 = vmatprep.subr.mxu0 0.0
    %736 = vmatpush1.msra.mxu0 0.0
    %737 = vmatprep.subr.mxu0 0.0
    %738 = vmatpush1.msra.mxu0 0.0
    %739 = vmatprep.subr.mxu0 0.0
    %740 = vmatpush1.msra.mxu0 0.0
    %741 = vmatprep.mubr.f32.mxu0 0.0
    %742 = vmatmul.mubr.f32.gmra.mrb[0].mxu0 %v656
    %v743 = vpop.f32.mrb[0].mxu0
    %v744 = vadd.f32 0.0, %v743
    %v745 = vpop.f32.mrb[0].mxu0
    %746 = vdwg.mxu0
    %v747 = vadd.f32 %v660, %v744
    %v748 = vxor.u32 %v747, 2147483648
    %v749 = vmul.f32 %v748, 1.442695
    %v750 = vpow.pop %v749
    %v751 = vadd.f32 %v750, 1.0
    %v752 = vrcp.pop %v751
    %v753 = vmul.f32 1.0, %v752
    %v754 = vmul.f32 %v656, 0.98
    %v755 = vmul.f32 %v753, 0.02
    %v756 = vadd.f32 %v754, %v755
    %s757 = scalar_lea.vmem [#allocation9], 48
    %758 = vst [vmem:[%s757] sm:$0xff] %v756
    %s759 = scalar_lea.vmem [#allocation3], 56
    %v760 = vld [vmem:[%s759] sm:$0xff]
    %v761 = vld [vmem:[#allocation6] sm:$0xff]
    %v762 = vld [vmem:[#allocation6 + $0x8] sm:$0xff]
    %v763 = vld [vmem:[#allocation6 + $0x10] sm:$0xff]
    %v764 = vld [vmem:[#allocation6 + $0x18] sm:$0xff]
    %v765 = vld [vmem:[#allocation6 + $0x20] sm:$0xff]
    %v766 = vld [vmem:[#allocation6 + $0x28] sm:$0xff]
    %v767 = vld [vmem:[#allocation6 + $0x30] sm:$0xff]
    %v768 = vld [vmem:[#allocation6 + $0x38] sm:$0xff]
    %v769 = vld [vmem:[#allocation6 + $0x40] sm:$0xff]
    %v770 = vld [vmem:[#allocation6 + $0x48] sm:$0xff]
    %v771 = vld [vmem:[#allocation6 + $0x50] sm:$0xff]
    %v772 = vld [vmem:[#allocation6 + $0x58] sm:$0xff]
    %v773 = vld [vmem:[#allocation6 + $0x60] sm:$0xff]
    %v774 = vld [vmem:[#allocation6 + $0x68] sm:$0xff]
    %v775 = vld [vmem:[#allocation6 + $0x70] sm:$0xff]
    %v776 = vld [vmem:[#allocation6 + $0x78] sm:$0xff]
    %777 = vmatprep.subr.mxu0 0.0
    %778 = vmatpush1.msra.mxu0 %v761
    %779 = vmatprep.subr.mxu0 0.0
    %780 = vmatpush1.msra.mxu0 %v762
    %781 = vmatprep.subr.mxu0 0.0
    %782 = vmatpush1.msra.mxu0 %v763
    %783 = vmatprep.subr.mxu0 0.0
    %784 = vmatpush1.msra.mxu0 %v764
    %785 = vmatprep.subr.mxu0 0.0
    %786 = vmatpush1.msra.mxu0 %v765
    %787 = vmatprep.subr.mxu0 0.0
    %788 = vmatpush1.msra.mxu0 %v766
    %789 = vmatprep.subr.mxu0 0.0
    %790 = vmatpush1.msra.mxu0 %v767
    %791 = vmatprep.subr.mxu0 0.0
    %792 = vmatpush1.msra.mxu0 %v768
    %793 = vmatprep.subr.mxu0 0.0
    %794 = vmatpush1.msra.mxu0 %v769
    %795 = vmatprep.subr.mxu0 0.0
    %796 = vmatpush1.msra.mxu0 %v770
    %797 = vmatprep.subr.mxu0 0.0
    %798 = vmatpush1.msra.mxu0 %v771
    %799 = vmatprep.subr.mxu0 0.0
    %800 = vmatpush1.msra.mxu0 %v772
    %801 = vmatprep.subr.mxu0 0.0
    %802 = vmatpush1.msra.mxu0 %v773
    %803 = vmatprep.subr.mxu0 0.0
    %804 = vmatpush1.msra.mxu0 %v774
    %805 = vmatprep.subr.mxu0 0.0
    %806 = vmatpush1.msra.mxu0 %v775
    %807 = vmatprep.subr.mxu0 0.0
    %808 = vmatpush1.msra.mxu0 %v776
    %809 = vmatprep.subr.mxu0 0.0
    %810 = vmatpush1.msra.mxu0 0.0
    %811 = vmatprep.subr.mxu0 0.0
    %812 = vmatpush1.msra.mxu0 0.0
    %813 = vmatprep.subr.mxu0 0.0
    %814 = vmatpush1.msra.mxu0 0.0
    %815 = vmatprep.subr.mxu0 0.0
    %816 = vmatpush1.msra.mxu0 0.0
    %817 = vmatprep.subr.mxu0 0.0
    %818 = vmatpush1.msra.mxu0 0.0
    %819 = vmatprep.subr.mxu0 0.0
    %820 = vmatpush1.msra.mxu0 0.0
    %821 = vmatprep.subr.mxu0 0.0
    %822 = vmatpush1.msra.mxu0 0.0
    %823 = vmatprep.subr.mxu0 0.0
    %824 = vmatpush1.msra.mxu0 0.0
    %825 = vmatprep.subr.mxu0 0.0
    %826 = vmatpush1.msra.mxu0 0.0
    %827 = vmatprep.subr.mxu0 0.0
    %828 = vmatpush1.msra.mxu0 0.0
    %829 = vmatprep.subr.mxu0 0.0
    %830 = vmatpush1.msra.mxu0 0.0
    %831 = vmatprep.subr.mxu0 0.0
    %832 = vmatpush1.msra.mxu0 0.0
    %833 = vmatprep.subr.mxu0 0.0
    %834 = vmatpush1.msra.mxu0 0.0
    %835 = vmatprep.subr.mxu0 0.0
    %836 = vmatpush1.msra.mxu0 0.0
    %837 = vmatprep.subr.mxu0 0.0
    %838 = vmatpush1.msra.mxu0 0.0
    %839 = vmatprep.subr.mxu0 0.0
    %840 = vmatpush1.msra.mxu0 0.0
    %841 = vmatprep.mubr.f32.mxu0 0.0
    %842 = vmatmul.mubr.f32.gmra.mrb[0].mxu0 %v756
    %v843 = vpop.f32.mrb[0].mxu0
    %v844 = vadd.f32 0.0, %v843
    %v845 = vpop.f32.mrb[0].mxu0
    %846 = vdwg.mxu0
    %v847 = vadd.f32 %v760, %v844
    %v848 = vxor.u32 %v847, 2147483648
    %v849 = vmul.f32 %v848, 1.442695
    %v850 = vpow.pop %v849
    %v851 = vadd.f32 %v850, 1.0
    %v852 = vrcp.pop %v851
    %v853 = vmul.f32 1.0, %v852
    %v854 = vmul.f32 %v756, 0.98
    %v855 = vmul.f32 %v853, 0.02
    %v856 = vadd.f32 %v854, %v855
    %s857 = scalar_lea.vmem [#allocation9], 56
    %858 = vst [vmem:[%s857] sm:$0xff] %v856
    %859 = vst [vmem:[#allocation2] sm:$0xff] %v856
    // Predicated region
    $region30: #{tpu_custom_call.1} parent=1 // pred_check
      _
    $region31: #{tpu_custom_call.1} parent=1 // pred_check_branch
      %861 = sbr.rel (0) target = $region33
    $region32: #{tpu_custom_call.1} parent=1 // pred_region
      %s863 = ssub.s32 1024, 1024
      %864 = vsyncadd [#allocation5], %s863
      %s865 = sshll.u32 [#allocation9], 4
      %s866 = int_to_ptr.vmem [resolvable:$true] %s865
      %871 = dma.vmem_to_hbm [thread:$0]  %s866, 1024, %s3, [#allocation5], 128, 128, 8
    $region33: #{tpu_custom_call.1} parent=1 // pred_fallthru
      _
    // Predicated region
    $region34: #{tpu_custom_call.1} parent=1 // pred_check
      _
    $region35: #{tpu_custom_call.1} parent=1 // pred_check_branch
      %873 = sbr.rel (0) target = $region37
    $region36: #{tpu_custom_call.1} parent=1 // pred_region
      %874 = dma.done [#allocation5], 1024
    $region37: #{tpu_custom_call.1} parent=1 // pred_fallthru
      _
    %875 = vsyncpa [#allocation4], 1
    %876 = vsyncpa [#allocation7], 1
    %877 = vsyncpa [#allocation5], 1

</llo_original>
